<compile_context>
chip_gen: v5e
topology: v5e:2x2
jax: 0.10.0
libtpu: 0.0.40
codegen_flags: <defaults>
</compile_context>

<pallas_src>
import functools

import jax
import jax.numpy as jnp
from jax.experimental import pallas as pl
from jax.experimental.pallas import tpu as pltpu


VMEM_SPEC = pl.BlockSpec(memory_space=pltpu.MemorySpace.VMEM)


# ---------------------------------------------------------------------------
# Single fused Pallas kernel: whole forward pass in one VMEM-resident block.
# ---------------------------------------------------------------------------
def _fused_forward_kernel(x_ref, w1_ref, b1_ref, w2_ref, b2_ref,
                          feat_ref, head_ref):
    # x:  (B, T, M)       raw mel features (f32)
    # w1: (M, K*D)        folded embed @ stacked-extractors   (bf16)
    # b1: (1, K*D)        folded bias                          (f32)
    # w2: (M, Cpad)       folded embed @ extractors @ head     (bf16)
    # b2: (1, Cpad)       folded head bias                     (f32)
    # feat_ref: (B, K*D)  'features' output (lane-dense: K*D multiple of 128)
    # head_ref: (B, Cpad) padded [logits | aux_logits | 0...] output
    x = x_ref[...].astype(jnp.float32)

    # Mean-pool over time, then the affine normalization.  Both commute with
    # the per-frame linear embed, so folding them in front of W1/W2 is exact
    # for the linear stand-in backbone.
    xm = jnp.mean(x, axis=1)                                    # (B, M)
    xm = (xm + 4.26) * (1.0 / (4.57 * 2.0))
    xm_bf = xm.astype(jnp.bfloat16)                             # bf16 MXU path

    feat_ref[...] = (
        jnp.dot(xm_bf, w1_ref[...], preferred_element_type=jnp.float32)
        + b1_ref[...]
    )                                                           # (B, K*D) f32

    head_ref[...] = (
        jnp.dot(xm_bf, w2_ref[...], preferred_element_type=jnp.float32)
        + b2_ref[...]
    )                                                           # (B, Cpad) f32


def fused_forward(x, w1, b1, w2, b2):
    B = x.shape[0]
    KD = w1.shape[1]
    Cpad = w2.shape[1]
    return pl.pallas_call(
        _fused_forward_kernel,
        out_shape=(
            jax.ShapeDtypeStruct((B, KD), jnp.float32),    # features
            jax.ShapeDtypeStruct((B, Cpad), jnp.float32),  # padded heads
        ),
        in_specs=[VMEM_SPEC] * 5,
        out_specs=(VMEM_SPEC, VMEM_SPEC),
        # Total footprint (x + W1 bf16 + W2 bf16 + biases + outputs) < 1 MiB:
        # comfortably under the scoped-VMEM defaults of v5e/v6e (16/32 MiB)
        # and v7x (32 MiB of its 64 MiB), so no explicit vmem_limit_bytes.
    )(x, w1, b1, w2, b2)


# ---------------------------------------------------------------------------
# MyAdaptiveNet (Pallas) — parameters built deterministically in-script.
# ---------------------------------------------------------------------------
class MyAdaptiveNetPallas:
    def __init__(self, key, mel_bins=128, out_dim=768, num_extractors=2,
                 nb_classes=16, last_task_size=8):
        self.out_dim = out_dim
        self.num_extractors = num_extractors
        self.feature_dim = out_dim * num_extractors
        self.nb_classes = nb_classes
        self.aux_out = last_task_size + 1

        ks = jax.random.split(key, 8)
        s = 0.02
        # TaskAgnosticExtractor (AST) stand-in, PyTorch layout (out, in).
        self.embed_w = s * jax.random.normal(ks[0], (out_dim, mel_bins), jnp.float32)
        self.embed_b = s * jax.random.normal(ks[1], (out_dim,), jnp.float32)
        # AdaptiveExtractors (Specialized_Vit) stand-ins: (out_dim, out_dim) each.
        self.adapt_w = [
            s * jax.random.normal(ks[2 + i], (out_dim, out_dim), jnp.float32)
            for i in range(num_extractors)
        ]
        self.adapt_b = [
            s * jax.random.normal(ks[4 + i], (out_dim,), jnp.float32)
            for i in range(num_extractors)
        ]
        # fc: SimpleLinear(feature_dim, nb_classes)
        self.fc_w = s * jax.random.normal(ks[6], (nb_classes, self.feature_dim),
                                          jnp.float32)
        self.fc_b = jnp.zeros((nb_classes,), jnp.float32)
        # aux_fc: SimpleLinear(out_dim, last_task_size + 1)
        self.aux_w = s * jax.random.normal(ks[7], (self.aux_out, out_dim),
                                           jnp.float32)
        self.aux_b = jnp.zeros((self.aux_out,), jnp.float32)

        # ---- Pre-folded / pre-laid-out parameters for the fused kernel ------
        # All folding is done once in f32 at init time; only the two matrices
        # that are streamed per-call are cast to bf16.
        embed_w_io = self.embed_w.T                                   # (M, D)
        embed_b_2d = self.embed_b.reshape(1, out_dim)                 # (1, D)
        adapt_w_stacked = jnp.concatenate(
            [w.T for w in self.adapt_w], axis=1)                      # (D, K*D)
        adapt_b_stacked = jnp.concatenate(self.adapt_b).reshape(
            1, self.feature_dim)                                      # (1, K*D)

        # fc + aux_fc merged into one lane-dense (>=128-wide) head.
        #   cols [0, C)      : fc (acts on the full feature vector)
        #   cols [C, C+A)    : aux_fc (acts only on the LAST out_dim features;
        #                      rows 0..feature_dim-out_dim-1 are zero)
        #   remaining cols   : zero padding up to a multiple of 128 lanes.
        C, A = nb_classes, self.aux_out
        head_width = max(128, ((C + A + 127) // 128) * 128)
        self.head_width = head_width
        head_w = jnp.zeros((self.feature_dim, head_width), jnp.float32)
        head_w = head_w.at[:, :C].set(self.fc_w.T)
        head_w = head_w.at[self.feature_dim - out_dim:, C:C + A].set(self.aux_w.T)
        head_b = jnp.zeros((1, head_width), jnp.float32)
        head_b = head_b.at[0, :C].set(self.fc_b)
        head_b = head_b.at[0, C:C + A].set(self.aux_b)

        # Fold embed into the stacked extractors:
        #   feats = ((xm_norm) @ embed_w_io + embed_b) @ adapt_w + adapt_b
        #         =  xm_norm @ W1 + b1
        w1_f32 = embed_w_io @ adapt_w_stacked                         # (M, K*D)
        b1_f32 = embed_b_2d @ adapt_w_stacked + adapt_b_stacked       # (1, K*D)
        # Fold the head as well:
        #   head = feats @ head_w + head_b = xm_norm @ W2 + b2
        w2_f32 = w1_f32 @ head_w                                      # (M, Cpad)
        b2_f32 = b1_f32 @ head_w + head_b                             # (1, Cpad)

        # Streamed weights in bf16 (halves HBM DMA); biases stay f32.
        self.w1 = w1_f32.astype(jnp.bfloat16)                         # (M, K*D)
        self.b1 = b1_f32                                              # (1, K*D)
        self.w2 = w2_f32.astype(jnp.bfloat16)                         # (M, Cpad)
        self.b2 = b2_f32                                              # (1, Cpad)

    def mel_feature(self, x):
        # Exact reproduction for inputs whose dim-1 is not 44100/64000/32000:
        # no spectrogram branch fires and squeeze(1) is a no-op -> identity.
        # TODO(synk): torchlibrosa Spectrogram/LogmelFilterBank (STFT) branches
        # for the 44100/64000/32000 waveform lengths have no clean Pallas
        # equivalent here and are not implemented.
        return x

    @functools.partial(jax.jit, static_argnums=0)
    def forward(self, x):
        x = self.mel_feature(x)                                       # (B, T, M)
        features, head = fused_forward(x, self.w1, self.b1, self.w2, self.b2)
        logits = head[:, :self.nb_classes]
        aux_logits = head[:, self.nb_classes:self.nb_classes + self.aux_out]
        return {"logits": logits, "aux_logits": aux_logits, "features": features}

    # Pure-JAX reference with the ORIGINAL (unfused, f32) op order, for checking.
    def forward_ref(self, x):
        x = (x + 4.26) / (4.57 * 2.0)
        toks = jnp.einsum("btm,dm->btd", x, self.embed_w) + self.embed_b
        feats = [jnp.mean(toks, axis=1) @ w.T + b
                 for w, b in zip(self.adapt_w, self.adapt_b)]
        features = jnp.concatenate(feats, axis=1)
        logits = features @ self.fc_w.T + self.fc_b
        aux_logits = features[:, -self.out_dim:] @ self.aux_w.T + self.aux_b
        return {"logits": logits, "aux_logits": aux_logits, "features": features}


if __name__ == "__main__":
    key = jax.random.PRNGKey(0)
    k_param, k_x = jax.random.split(key)

    B, T, M = 2, 8, 128  # batch, time frames, mel bins (T != 44100/64000/32000)
    net = MyAdaptiveNetPallas(k_param, mel_bins=M, out_dim=768,
                              num_extractors=2, nb_classes=16, last_task_size=8)

    x = jax.random.normal(k_x, (B, T, M), jnp.float32)

    out = net.forward(x)
    jax.block_until_ready(out)

    ref = net.forward_ref(x)
    # Tolerances account for bf16-stored streamed weights (biases / accumulation
    # / outputs are f32); observed errors are ~1e-4 in absolute terms.
    for k in ("logits", "aux_logits", "features"):
        assert out[k].shape == ref[k].shape, k
        assert jnp.allclose(out[k], ref[k], atol=5e-3, rtol=5e-3), k

    print("KERNEL_OK")
</pallas_src>

<mosaic_0001>
module attributes {stable_mosaic.version = 11 : i64} {
  func.func @_fused_forward_kernel(%arg0: memref<2x8x128xf32, #tpu.memory_space<vmem>>, %arg1: memref<128x1536xbf16, #tpu.memory_space<vmem>>, %arg2: memref<1x1536xf32, #tpu.memory_space<vmem>>, %arg3: memref<128x128xbf16, #tpu.memory_space<vmem>>, %arg4: memref<1x128xf32, #tpu.memory_space<vmem>>, %arg5: memref<2x1536xf32, #tpu.memory_space<vmem>>, %arg6: memref<2x128xf32, #tpu.memory_space<vmem>>) attributes {dimension_semantics = [], scalar_prefetch = 0 : i64, scratch_operands = 0 : i64, tpu.core_type = #tpu.core_type<tc>} {
    %c0 = arith.constant 0 : index
    %c0_0 = arith.constant 0 : index
    %c0_1 = arith.constant 0 : index
    %0 = vector.load %arg0[%c0, %c0_0, %c0_1] : memref<2x8x128xf32, #tpu.memory_space<vmem>>, vector<2x8x128xf32>
    %cst = arith.constant dense<0.000000e+00> : vector<2x128xf32>
    %1 = vector.multi_reduction <add>, %0, %cst [1] : vector<2x8x128xf32> to vector<2x128xf32>
    %cst_2 = arith.constant 8.000000e+00 : f32
    %2 = vector.broadcast %cst_2 : f32 to vector<2x128xf32>
    %3 = arith.divf %1, %2 : vector<2x128xf32>
    %cst_3 = arith.constant 4.260000e+00 : f32
    %4 = vector.broadcast %cst_3 : f32 to vector<2x128xf32>
    %5 = arith.addf %3, %4 : vector<2x128xf32>
    %cst_4 = arith.constant 0.109409191 : f32
    %6 = vector.broadcast %cst_4 : f32 to vector<2x128xf32>
    %7 = arith.mulf %5, %6 : vector<2x128xf32>
    %8 = arith.truncf %7 : vector<2x128xf32> to vector<2x128xbf16>
    %c0_5 = arith.constant 0 : index
    %c0_6 = arith.constant 0 : index
    %9 = vector.load %arg1[%c0_5, %c0_6] : memref<128x1536xbf16, #tpu.memory_space<vmem>>, vector<128x1536xbf16>
    %cst_7 = arith.constant dense<0.000000e+00> : vector<2x1536xf32>
    %10 = tpu.matmul %8, %9, %cst_7 {dimension_numbers = #tpu.dot_dimension_numbers<[1], [0], [0], [1], [0, 0, 1, 1], [], []>} : vector<2x128xbf16>, vector<128x1536xbf16>, vector<2x1536xf32> -> vector<2x1536xf32>
    %c0_8 = arith.constant 0 : index
    %c0_9 = arith.constant 0 : index
    %11 = vector.load %arg2[%c0_8, %c0_9] : memref<1x1536xf32, #tpu.memory_space<vmem>>, vector<1x1536xf32>
    %12 = vector.broadcast %11 : vector<1x1536xf32> to vector<2x1536xf32>
    %13 = arith.addf %10, %12 : vector<2x1536xf32>
    %c0_10 = arith.constant 0 : index
    %c0_11 = arith.constant 0 : index
    %14 = vector.load %arg5[%c0_10, %c0_11] : memref<2x1536xf32, #tpu.memory_space<vmem>>, vector<2x1536xf32>
    tpu.vector_store %arg5[%c0_10, %c0_11], %13 {strides = array<i32>} : memref<2x1536xf32, #tpu.memory_space<vmem>>, vector<2x1536xf32>,
    %c0_12 = arith.constant 0 : index
    %c0_13 = arith.constant 0 : index
    %15 = vector.load %arg3[%c0_12, %c0_13] : memref<128x128xbf16, #tpu.memory_space<vmem>>, vector<128x128xbf16>
    %cst_14 = arith.constant dense<0.000000e+00> : vector<2x128xf32>
    %16 = tpu.matmul %8, %15, %cst_14 {dimension_numbers = #tpu.dot_dimension_numbers<[1], [0], [0], [1], [0, 0, 1, 1], [], []>} : vector<2x128xbf16>, vector<128x128xbf16>, vector<2x128xf32> -> vector<2x128xf32>
    %c0_15 = arith.constant 0 : index
    %c0_16 = arith.constant 0 : index
    %17 = vector.load %arg4[%c0_15, %c0_16] : memref<1x128xf32, #tpu.memory_space<vmem>>, vector<1x128xf32>
    %18 = vector.broadcast %17 : vector<1x128xf32> to vector<2x128xf32>
    %19 = arith.addf %16, %18 : vector<2x128xf32>
    %c0_17 = arith.constant 0 : index
    %c0_18 = arith.constant 0 : index
    %20 = vector.load %arg6[%c0_17, %c0_18] : memref<2x128xf32, #tpu.memory_space<vmem>>, vector<2x128xf32>
    tpu.vector_store %arg6[%c0_17, %c0_18], %19 {strides = array<i32>} : memref<2x128xf32, #tpu.memory_space<vmem>>, vector<2x128xf32>,
    return
  }
}

</mosaic_0001>

<llo_original>
// kernel: forward.1
$region0: #{forward.1}
  #allocation0 [shape = 'u32[]', space=smem, size = 0x4, offset = 0x4, fixed_abs, tag = 'smem constant byte address 0x4 - core index']
  #allocation1 [shape = 'u32[72,128]{1,0:T(1,128)}', space=vmem, size = 0x9000, scoped, tag = 'internal scratch']
  %s0 = inlined_call_operand.hbm [shape: f32[2,8,128], index: 0, kind: input, shape index: {}]
  %s1 = inlined_call_operand.hbm [shape: bf16[128,1536], index: 1, kind: input, shape index: {}]
  %s2 = inlined_call_operand.hbm [shape: f32[1,1536], index: 2, kind: input, shape index: {}]
  %s3 = inlined_call_operand.hbm [shape: bf16[128,128], index: 3, kind: input, shape index: {}]
  %s4 = inlined_call_operand.vmem [shape: f32[1,128], index: 4, kind: input, shape index: {}]
  %s5 = inlined_call_operand.hbm [shape: f32[2,1536], index: 5, kind: output, shape index: {0}]
  %s6 = inlined_call_operand.vmem [shape: f32[2,128], index: 6, kind: output, shape index: {1}]
  %7 = xla_tuple %s5, %s6
  %s8 = sld [smem:[#allocation0]]
  $region54: #{forward.1} parent=0
    _
  %s10 = ssub.s32 1, %s8
  %s11 = scalar_select 0, %s10, %s8
  $region1: #{forward.1} parent=0
    #allocation2 [shape = 'u8[8192]{0}', space=vmem, size = 0x2000, scoped, tag = 'input window, operand 0, single buffered']
    #allocation3 [shape = 's32[1]{0}', space=sflag, size = 0x4, scoped, tag = 'scoped memory for forward.1']
    #allocation4 [shape = 's32[1]{0}', space=sflag, size = 0x4, scoped, tag = 'scoped memory for forward.1']
    #allocation5 [shape = 'u8[393216]{0}', space=vmem, size = 0x60000, scoped, tag = 'input window, operand 1, single buffered']
    #allocation6 [shape = 's32[1]{0}', space=sflag, size = 0x4, scoped, tag = 'scoped memory for forward.1']
    #allocation7 [shape = 'u8[6144]{0}', space=vmem, size = 0x1800, scoped, tag = 'input window, operand 2, single buffered']
    #allocation8 [shape = 'u8[32768]{0}', space=vmem, size = 0x8000, scoped, tag = 'input window, operand 3, single buffered']
    #allocation9 [shape = 's32[1]{0}', space=sflag, size = 0x4, scoped, tag = 'scoped memory for forward.1']
    #allocation10 [shape = 'u8[12288]{0}', space=vmem, size = 0x3000, scoped, tag = 'output window, operand 0, single buffered']
    %12 = vsyncpa [#allocation3], 0
    %13 = vsyncpa [#allocation6], 0
    %14 = vsyncpa [#allocation9], 0
    %15 = vsyncpa [#allocation4], 0
    // Predicated region
    $region2: #{forward.1} parent=1 // pred_check
      _
    $region3: #{forward.1} parent=1 // pred_check_branch
      %17 = sbr.rel (0) target = $region5
    $region4: #{forward.1} parent=1 // pred_region
      %19 = vsyncadd [#allocation3], 0
      %s20 = sshll.u32 %s0, 4
      %s21 = int_to_ptr.hbm [resolvable:$true] %s20
      %s22 = sshll.u32 [#allocation2], 4
      %s23 = int_to_ptr.vmem [resolvable:$true] %s22
      %28 = dma.hbm_to_vmem [thread:$0]  %s21, 256, %s23, [#allocation3], 128, 128, 8
    $region5: #{forward.1} parent=1 // pred_fallthru
      _
    // Predicated region
    $region6: #{forward.1} parent=1 // pred_check
      _
    $region7: #{forward.1} parent=1 // pred_check_branch
      %30 = sbr.rel (0) target = $region9
    $region8: #{forward.1} parent=1 // pred_region
      %32 = vsyncadd [#allocation6], 0
      %s33 = sshll.u32 %s1, 4
      %s34 = int_to_ptr.hbm [resolvable:$true] %s33
      %s35 = sshll.u32 [#allocation5], 4
      %s36 = int_to_ptr.vmem [resolvable:$true] %s35
      %41 = dma.hbm_to_vmem [thread:$0]  %s34, 12288, %s36, [#allocation6], 768, 768, 48
    $region9: #{forward.1} parent=1 // pred_fallthru
      _
    // Predicated region
    $region10: #{forward.1} parent=1 // pred_check
      _
    $region11: #{forward.1} parent=1 // pred_check_branch
      %43 = sbr.rel (0) target = $region13
    $region12: #{forward.1} parent=1 // pred_region
      %45 = vsyncadd [#allocation6], 0
      %s47 = sshll.u32 %s2, 4
      %s48 = int_to_ptr.hbm [resolvable:$true] %s47
      %s49 = sshll.u32 [#allocation7], 4
      %s50 = int_to_ptr.vmem [resolvable:$true] %s49
      %52 = dma.hbm_to_vmem [thread:$0]  %s48, 192, %s50, [#allocation6]
    $region13: #{forward.1} parent=1 // pred_fallthru
      _
    // Predicated region
    $region14: #{forward.1} parent=1 // pred_check
      _
    $region15: #{forward.1} parent=1 // pred_check_branch
      %54 = sbr.rel (0) target = $region17
    $region16: #{forward.1} parent=1 // pred_region
      %56 = vsyncadd [#allocation9], 0
      %s57 = sshll.u32 %s3, 4
      %s58 = int_to_ptr.hbm [resolvable:$true] %s57
      %s59 = sshll.u32 [#allocation8], 4
      %s60 = int_to_ptr.vmem [resolvable:$true] %s59
      %65 = dma.hbm_to_vmem [thread:$0]  %s58, 1024, %s60, [#allocation9], 64, 64, 4
    $region17: #{forward.1} parent=1 // pred_fallthru
      _
    // Predicated region
    $region18: #{forward.1} parent=1 // pred_check
      _
    $region19: #{forward.1} parent=1 // pred_check_branch
      %67 = sbr.rel (0) target = $region21
    $region20: #{forward.1} parent=1 // pred_region
      _
    $region21: #{forward.1} parent=1 // pred_fallthru
      _
    // Predicated region
    $region22: #{forward.1} parent=1 // pred_check
      _
    $region23: #{forward.1} parent=1 // pred_check_branch
      %69 = sbr.rel (0) target = $region25
    $region24: #{forward.1} parent=1 // pred_region
      %71 = dma.done [#allocation3], 256
    $region25: #{forward.1} parent=1 // pred_fallthru
      _
    // Predicated region
    $region26: #{forward.1} parent=1 // pred_check
      _
    $region27: #{forward.1} parent=1 // pred_check_branch
      %73 = sbr.rel (0) target = $region29
    $region28: #{forward.1} parent=1 // pred_region
      %75 = dma.done [#allocation6], 12288
    $region29: #{forward.1} parent=1 // pred_fallthru
      _
    // Predicated region
    $region30: #{forward.1} parent=1 // pred_check
      _
    $region31: #{forward.1} parent=1 // pred_check_branch
      %77 = sbr.rel (0) target = $region33
    $region32: #{forward.1} parent=1 // pred_region
      %79 = dma.done [#allocation6], 192
    $region33: #{forward.1} parent=1 // pred_fallthru
      _
    // Predicated region
    $region34: #{forward.1} parent=1 // pred_check
      _
    $region35: #{forward.1} parent=1 // pred_check_branch
      %81 = sbr.rel (0) target = $region37
    $region36: #{forward.1} parent=1 // pred_region
      %83 = dma.done [#allocation9], 1024
    $region37: #{forward.1} parent=1 // pred_fallthru
      _
    %v84 = vld [vmem:[#allocation2] sm:$0xff]
    %v85 = vld [vmem:[#allocation2 + $0x8] sm:$0xff]
    %v86 = vrot.slane %v84, 4
    %v87 = vadd.f32 %v84, %v86
    %v88 = vrot.slane %v87, 2
    %v89 = vadd.f32 %v87, %v88
    %v90 = vrot.slane %v89, 1
    %v91 = vadd.f32 %v89, %v90
    %v92 = vrot.slane %v85, 4
    %v93 = vadd.f32 %v85, %v92
    %v94 = vrot.slane %v93, 2
    %v95 = vadd.f32 %v93, %v94
    %v96 = vrot.slane %v95, 1
    %v97 = vadd.f32 %v95, %v96
    %v98 = vrcp.pop 8.0
    %v99 = vmul.f32 8.0, %v98
    %v100 = vsub.f32 1.0, %v99
    %v101 = vmul.f32 %v98, %v100
    %v102 = vadd.f32 %v98, %v101
    %vm103 = vweird.f32 %v98
    %v104 = vsel %vm103, %v98, %v102
    %v105 = vmul.f32 %v91, %v104
    %v106 = vmul.f32 %v97, %v104
    %v107 = vadd.f32 %v105, 4.26
    %v108 = vadd.f32 %v106, 4.26
    %v109 = vmul.f32 %v107, 0.10940919
    %v110 = vmul.f32 %v108, 0.10940919
    %v111 = vpack.c.bf16 %v109, %v109
    %v112 = vpack.c.bf16 %v110, %v110
    %v113 = vld [vmem:[#allocation5] sm:$0xff]
    %v114 = vld [vmem:[#allocation5 + $0x8] sm:$0xff]
    %v115 = vld [vmem:[#allocation5 + $0x10] sm:$0xff]
    %v116 = vld [vmem:[#allocation5 + $0x18] sm:$0xff]
    %v117 = vld [vmem:[#allocation5 + $0x20] sm:$0xff]
    %v118 = vld [vmem:[#allocation5 + $0x28] sm:$0xff]
    %v119 = vld [vmem:[#allocation5 + $0x30] sm:$0xff]
    %v120 = vld [vmem:[#allocation5 + $0x38] sm:$0xff]
    %v121 = vld [vmem:[#allocation5 + $0x40] sm:$0xff]
    %v122 = vld [vmem:[#allocation5 + $0x48] sm:$0xff]
    %v123 = vld [vmem:[#allocation5 + $0x50] sm:$0xff]
    %v124 = vld [vmem:[#allocation5 + $0x58] sm:$0xff]
    %v125 = vld [vmem:[#allocation5 + $0x60] sm:$0xff]
    %v126 = vld [vmem:[#allocation5 + $0x68] sm:$0xff]
    %v127 = vld [vmem:[#allocation5 + $0x70] sm:$0xff]
    %v128 = vld [vmem:[#allocation5 + $0x78] sm:$0xff]
    %v129 = vld [vmem:[#allocation5 + $0x80] sm:$0xff]
    %v130 = vld [vmem:[#allocation5 + $0x88] sm:$0xff]
    %v131 = vld [vmem:[#allocation5 + $0x90] sm:$0xff]
    %v132 = vld [vmem:[#allocation5 + $0x98] sm:$0xff]
    %v133 = vld [vmem:[#allocation5 + $0xa0] sm:$0xff]
    %v134 = vld [vmem:[#allocation5 + $0xa8] sm:$0xff]
    %v135 = vld [vmem:[#allocation5 + $0xb0] sm:$0xff]
    %v136 = vld [vmem:[#allocation5 + $0xb8] sm:$0xff]
    %v137 = vld [vmem:[#allocation5 + $0xc0] sm:$0xff]
    %v138 = vld [vmem:[#allocation5 + $0xc8] sm:$0xff]
    %v139 = vld [vmem:[#allocation5 + $0xd0] sm:$0xff]
    %v140 = vld [vmem:[#allocation5 + $0xd8] sm:$0xff]
    %v141 = vld [vmem:[#allocation5 + $0xe0] sm:$0xff]
    %v142 = vld [vmem:[#allocation5 + $0xe8] sm:$0xff]
    %v143 = vld [vmem:[#allocation5 + $0xf0] sm:$0xff]
    %v144 = vld [vmem:[#allocation5 + $0xf8] sm:$0xff]
    %v145 = vld [vmem:[#allocation5 + $0x100] sm:$0xff]
    %v146 = vld [vmem:[#allocation5 + $0x108] sm:$0xff]
    %v147 = vld [vmem:[#allocation5 + $0x110] sm:$0xff]
    %v148 = vld [vmem:[#allocation5 + $0x118] sm:$0xff]
    %v149 = vld [vmem:[#allocation5 + $0x120] sm:$0xff]
    %v150 = vld [vmem:[#allocation5 + $0x128] sm:$0xff]
    %v151 = vld [vmem:[#allocation5 + $0x130] sm:$0xff]
    %v152 = vld [vmem:[#allocation5 + $0x138] sm:$0xff]
    %v153 = vld [vmem:[#allocation5 + $0x140] sm:$0xff]
    %v154 = vld [vmem:[#allocation5 + $0x148] sm:$0xff]
    %v155 = vld [vmem:[#allocation5 + $0x150] sm:$0xff]
    %v156 = vld [vmem:[#allocation5 + $0x158] sm:$0xff]
    %v157 = vld [vmem:[#allocation5 + $0x160] sm:$0xff]
    %v158 = vld [vmem:[#allocation5 + $0x168] sm:$0xff]
    %v159 = vld [vmem:[#allocation5 + $0x170] sm:$0xff]
    %v160 = vld [vmem:[#allocation5 + $0x178] sm:$0xff]
    %v161 = vld [vmem:[#allocation5 + $0x180] sm:$0xff]
    %v162 = vld [vmem:[#allocation5 + $0x188] sm:$0xff]
    %v163 = vld [vmem:[#allocation5 + $0x190] sm:$0xff]
    %v164 = vld [vmem:[#allocation5 + $0x198] sm:$0xff]
    %v165 = vld [vmem:[#allocation5 + $0x1a0] sm:$0xff]
    %v166 = vld [vmem:[#allocation5 + $0x1a8] sm:$0xff]
    %v167 = vld [vmem:[#allocation5 + $0x1b0] sm:$0xff]
    %v168 = vld [vmem:[#allocation5 + $0x1b8] sm:$0xff]
    %v169 = vld [vmem:[#allocation5 + $0x1c0] sm:$0xff]
    %v170 = vld [vmem:[#allocation5 + $0x1c8] sm:$0xff]
    %v171 = vld [vmem:[#allocation5 + $0x1d0] sm:$0xff]
    %v172 = vld [vmem:[#allocation5 + $0x1d8] sm:$0xff]
    %v173 = vld [vmem:[#allocation5 + $0x1e0] sm:$0xff]
    %v174 = vld [vmem:[#allocation5 + $0x1e8] sm:$0xff]
    %v175 = vld [vmem:[#allocation5 + $0x1f0] sm:$0xff]
    %v176 = vld [vmem:[#allocation5 + $0x1f8] sm:$0xff]
    %v177 = vld [vmem:[#allocation5 + $0x200] sm:$0xff]
    %v178 = vld [vmem:[#allocation5 + $0x208] sm:$0xff]
    %v179 = vld [vmem:[#allocation5 + $0x210] sm:$0xff]
    %v180 = vld [vmem:[#allocation5 + $0x218] sm:$0xff]
    %v181 = vld [vmem:[#allocation5 + $0x220] sm:$0xff]
    %v182 = vld [vmem:[#allocation5 + $0x228] sm:$0xff]
    %v183 = vld [vmem:[#allocation5 + $0x230] sm:$0xff]
    %v184 = vld [vmem:[#allocation5 + $0x238] sm:$0xff]
    %v185 = vld [vmem:[#allocation5 + $0x240] sm:$0xff]
    %v186 = vld [vmem:[#allocation5 + $0x248] sm:$0xff]
    %v187 = vld [vmem:[#allocation5 + $0x250] sm:$0xff]
    %v188 = vld [vmem:[#allocation5 + $0x258] sm:$0xff]
    %v189 = vld [vmem:[#allocation5 + $0x260] sm:$0xff]
    %v190 = vld [vmem:[#allocation5 + $0x268] sm:$0xff]
    %v191 = vld [vmem:[#allocation5 + $0x270] sm:$0xff]
    %v192 = vld [vmem:[#allocation5 + $0x278] sm:$0xff]
    %v193 = vld [vmem:[#allocation5 + $0x280] sm:$0xff]
    %v194 = vld [vmem:[#allocation5 + $0x288] sm:$0xff]
    %v195 = vld [vmem:[#allocation5 + $0x290] sm:$0xff]
    %v196 = vld [vmem:[#allocation5 + $0x298] sm:$0xff]
    %v197 = vld [vmem:[#allocation5 + $0x2a0] sm:$0xff]
    %v198 = vld [vmem:[#allocation5 + $0x2a8] sm:$0xff]
    %v199 = vld [vmem:[#allocation5 + $0x2b0] sm:$0xff]
    %v200 = vld [vmem:[#allocation5 + $0x2b8] sm:$0xff]
    %v201 = vld [vmem:[#allocation5 + $0x2c0] sm:$0xff]
    %v202 = vld [vmem:[#allocation5 + $0x2c8] sm:$0xff]
    %v203 = vld [vmem:[#allocation5 + $0x2d0] sm:$0xff]
    %v204 = vld [vmem:[#allocation5 + $0x2d8] sm:$0xff]
    %v205 = vld [vmem:[#allocation5 + $0x2e0] sm:$0xff]
    %v206 = vld [vmem:[#allocation5 + $0x2e8] sm:$0xff]
    %v207 = vld [vmem:[#allocation5 + $0x2f0] sm:$0xff]
    %v208 = vld [vmem:[#allocation5 + $0x2f8] sm:$0xff]
    %v209 = vld [vmem:[#allocation7] sm:$0xff]
    %v210 = vld [vmem:[#allocation7 + $0x8] sm:$0xf]
    %v213 = vperm.slane %v209, 0
    %v214 = vperm.slane %v209, 1
    %v215 = vperm.slane %v209, 2
    %v216 = vperm.slane %v209, 3
    %v217 = vperm.slane %v209, 4
    %v218 = vperm.slane %v209, 5
    %v219 = vperm.slane %v209, 6
    %v220 = vperm.slane %v209, 7
    %v221 = vperm.slane %v210, 0
    %v222 = vperm.slane %v210, 1
    %v223 = vperm.slane %v210, 2
    %v224 = vperm.slane %v210, 3
    %v239 = vunpack.c.l.b16 %v111
    %v240 = vunpack.c.l.b16 %v112
    %vm241 = vcmask 1041409
    %v242 = vsel %vm241, %v240, %v239
    %v243 = vpack.c.b16 %v242, %v242
    %v341 = vunpack.c.l.b16 %v113
    %v342 = vunpack.c.h.b16 %v113
    %v343 = vunpack.c.l.b16 %v114
    %v344 = vunpack.c.h.b16 %v114
    %v345 = vunpack.c.l.b16 %v115
    %v346 = vunpack.c.h.b16 %v115
    %v347 = vunpack.c.l.b16 %v116
    %v348 = vunpack.c.h.b16 %v116
    %v349 = vunpack.c.l.b16 %v117
    %v350 = vunpack.c.h.b16 %v117
    %v351 = vunpack.c.l.b16 %v118
    %v352 = vunpack.c.h.b16 %v118
    %v353 = vunpack.c.l.b16 %v119
    %v354 = vunpack.c.h.b16 %v119
    %v355 = vunpack.c.l.b16 %v120
    %v356 = vunpack.c.h.b16 %v120
    %v357 = vunpack.c.l.b16 %v121
    %v358 = vunpack.c.h.b16 %v121
    %v359 = vunpack.c.l.b16 %v122
    %v360 = vunpack.c.h.b16 %v122
    %v361 = vunpack.c.l.b16 %v123
    %v362 = vunpack.c.h.b16 %v123
    %v363 = vunpack.c.l.b16 %v124
    %v364 = vunpack.c.h.b16 %v124
    %v365 = vunpack.c.l.b16 %v125
    %v366 = vunpack.c.h.b16 %v125
    %v367 = vunpack.c.l.b16 %v126
    %v368 = vunpack.c.h.b16 %v126
    %v369 = vunpack.c.l.b16 %v127
    %v370 = vunpack.c.h.b16 %v127
    %v371 = vunpack.c.l.b16 %v128
    %v372 = vunpack.c.h.b16 %v128
    %v373 = vunpack.c.l.b16 %v129
    %v374 = vunpack.c.h.b16 %v129
    %v375 = vunpack.c.l.b16 %v130
    %v376 = vunpack.c.h.b16 %v130
    %v377 = vunpack.c.l.b16 %v131
    %v378 = vunpack.c.h.b16 %v131
    %v379 = vunpack.c.l.b16 %v132
    %v380 = vunpack.c.h.b16 %v132
    %v381 = vunpack.c.l.b16 %v133
    %v382 = vunpack.c.h.b16 %v133
    %v383 = vunpack.c.l.b16 %v134
    %v384 = vunpack.c.h.b16 %v134
    %v385 = vunpack.c.l.b16 %v135
    %v386 = vunpack.c.h.b16 %v135
    %v387 = vunpack.c.l.b16 %v136
    %v388 = vunpack.c.h.b16 %v136
    %v389 = vunpack.c.l.b16 %v137
    %v390 = vunpack.c.h.b16 %v137
    %v391 = vunpack.c.l.b16 %v138
    %v392 = vunpack.c.h.b16 %v138
    %v393 = vunpack.c.l.b16 %v139
    %v394 = vunpack.c.h.b16 %v139
    %v395 = vunpack.c.l.b16 %v140
    %v396 = vunpack.c.h.b16 %v140
    %v397 = vunpack.c.l.b16 %v141
    %v398 = vunpack.c.h.b16 %v141
    %v399 = vunpack.c.l.b16 %v142
    %v400 = vunpack.c.h.b16 %v142
    %v401 = vunpack.c.l.b16 %v143
    %v402 = vunpack.c.h.b16 %v143
    %v403 = vunpack.c.l.b16 %v144
    %v404 = vunpack.c.h.b16 %v144
    %v405 = vunpack.c.l.b16 %v145
    %v406 = vunpack.c.h.b16 %v145
    %v407 = vunpack.c.l.b16 %v146
    %v408 = vunpack.c.h.b16 %v146
    %v409 = vunpack.c.l.b16 %v147
    %v410 = vunpack.c.h.b16 %v147
    %v411 = vunpack.c.l.b16 %v148
    %v412 = vunpack.c.h.b16 %v148
    %v413 = vunpack.c.l.b16 %v149
    %v414 = vunpack.c.h.b16 %v149
    %v415 = vunpack.c.l.b16 %v150
    %v416 = vunpack.c.h.b16 %v150
    %v417 = vunpack.c.l.b16 %v151
    %v418 = vunpack.c.h.b16 %v151
    %v419 = vunpack.c.l.b16 %v152
    %v420 = vunpack.c.h.b16 %v152
    %v421 = vunpack.c.l.b16 %v153
    %v422 = vunpack.c.h.b16 %v153
    %v423 = vunpack.c.l.b16 %v154
    %v424 = vunpack.c.h.b16 %v154
    %v425 = vunpack.c.l.b16 %v155
    %v426 = vunpack.c.h.b16 %v155
    %v427 = vunpack.c.l.b16 %v156
    %v428 = vunpack.c.h.b16 %v156
    %v429 = vunpack.c.l.b16 %v157
    %v430 = vunpack.c.h.b16 %v157
    %v431 = vunpack.c.l.b16 %v158
    %v432 = vunpack.c.h.b16 %v158
    %v433 = vunpack.c.l.b16 %v159
    %v434 = vunpack.c.h.b16 %v159
    %v435 = vunpack.c.l.b16 %v160
    %v436 = vunpack.c.h.b16 %v160
    %v437 = vunpack.c.l.b16 %v161
    %v438 = vunpack.c.h.b16 %v161
    %v439 = vunpack.c.l.b16 %v162
    %v440 = vunpack.c.h.b16 %v162
    %v441 = vunpack.c.l.b16 %v163
    %v442 = vunpack.c.h.b16 %v163
    %v443 = vunpack.c.l.b16 %v164
    %v444 = vunpack.c.h.b16 %v164
    %v445 = vunpack.c.l.b16 %v165
    %v446 = vunpack.c.h.b16 %v165
    %v447 = vunpack.c.l.b16 %v166
    %v448 = vunpack.c.h.b16 %v166
    %v449 = vunpack.c.l.b16 %v167
    %v450 = vunpack.c.h.b16 %v167
    %v451 = vunpack.c.l.b16 %v168
    %v452 = vunpack.c.h.b16 %v168
    %v453 = vunpack.c.l.b16 %v169
    %v454 = vunpack.c.h.b16 %v169
    %v455 = vunpack.c.l.b16 %v170
    %v456 = vunpack.c.h.b16 %v170
    %v457 = vunpack.c.l.b16 %v171
    %v458 = vunpack.c.h.b16 %v171
    %v459 = vunpack.c.l.b16 %v172
    %v460 = vunpack.c.h.b16 %v172
    %v461 = vunpack.c.l.b16 %v173
    %v462 = vunpack.c.h.b16 %v173
    %v463 = vunpack.c.l.b16 %v174
    %v464 = vunpack.c.h.b16 %v174
    %v465 = vunpack.c.l.b16 %v175
    %v466 = vunpack.c.h.b16 %v175
    %v467 = vunpack.c.l.b16 %v176
    %v468 = vunpack.c.h.b16 %v176
    %v469 = vunpack.c.l.b16 %v177
    %v470 = vunpack.c.h.b16 %v177
    %v471 = vunpack.c.l.b16 %v178
    %v472 = vunpack.c.h.b16 %v178
    %v473 = vunpack.c.l.b16 %v179
    %v474 = vunpack.c.h.b16 %v179
    %v475 = vunpack.c.l.b16 %v180
    %v476 = vunpack.c.h.b16 %v180
    %v477 = vunpack.c.l.b16 %v181
    %v478 = vunpack.c.h.b16 %v181
    %v479 = vunpack.c.l.b16 %v182
    %v480 = vunpack.c.h.b16 %v182
    %v481 = vunpack.c.l.b16 %v183
    %v482 = vunpack.c.h.b16 %v183
    %v483 = vunpack.c.l.b16 %v184
    %v484 = vunpack.c.h.b16 %v184
    %v485 = vunpack.c.l.b16 %v185
    %v486 = vunpack.c.h.b16 %v185
    %v487 = vunpack.c.l.b16 %v186
    %v488 = vunpack.c.h.b16 %v186
    %v489 = vunpack.c.l.b16 %v187
    %v490 = vunpack.c.h.b16 %v187
    %v491 = vunpack.c.l.b16 %v188
    %v492 = vunpack.c.h.b16 %v188
    %v493 = vunpack.c.l.b16 %v189
    %v494 = vunpack.c.h.b16 %v189
    %v495 = vunpack.c.l.b16 %v190
    %v496 = vunpack.c.h.b16 %v190
    %v497 = vunpack.c.l.b16 %v191
    %v498 = vunpack.c.h.b16 %v191
    %v499 = vunpack.c.l.b16 %v192
    %v500 = vunpack.c.h.b16 %v192
    %v501 = vunpack.c.l.b16 %v193
    %v502 = vunpack.c.h.b16 %v193
    %v503 = vunpack.c.l.b16 %v194
    %v504 = vunpack.c.h.b16 %v194
    %v505 = vunpack.c.l.b16 %v195
    %v506 = vunpack.c.h.b16 %v195
    %v507 = vunpack.c.l.b16 %v196
    %v508 = vunpack.c.h.b16 %v196
    %v509 = vunpack.c.l.b16 %v197
    %v510 = vunpack.c.h.b16 %v197
    %v511 = vunpack.c.l.b16 %v198
    %v512 = vunpack.c.h.b16 %v198
    %v513 = vunpack.c.l.b16 %v199
    %v514 = vunpack.c.h.b16 %v199
    %v515 = vunpack.c.l.b16 %v200
    %v516 = vunpack.c.h.b16 %v200
    %v517 = vunpack.c.l.b16 %v201
    %v518 = vunpack.c.h.b16 %v201
    %v519 = vunpack.c.l.b16 %v202
    %v520 = vunpack.c.h.b16 %v202
    %v521 = vunpack.c.l.b16 %v203
    %v522 = vunpack.c.h.b16 %v203
    %v523 = vunpack.c.l.b16 %v204
    %v524 = vunpack.c.h.b16 %v204
    %v525 = vunpack.c.l.b16 %v205
    %v526 = vunpack.c.h.b16 %v205
    %v527 = vunpack.c.l.b16 %v206
    %v528 = vunpack.c.h.b16 %v206
    %v529 = vunpack.c.l.b16 %v207
    %v530 = vunpack.c.h.b16 %v207
    %v531 = vunpack.c.l.b16 %v208
    %v532 = vunpack.c.h.b16 %v208
    %v533 = vpack.c.b16 %v353, %v341
    %v534 = vpack.c.b16 %v354, %v342
    %v535 = vpack.c.b16 %v355, %v343
    %v536 = vpack.c.b16 %v356, %v344
    %v537 = vpack.c.b16 %v357, %v345
    %v538 = vpack.c.b16 %v358, %v346
    %v539 = vpack.c.b16 %v359, %v347
    %v540 = vpack.c.b16 %v360, %v348
    %v541 = vpack.c.b16 %v361, %v349
    %v542 = vpack.c.b16 %v362, %v350
    %v543 = vpack.c.b16 %v363, %v351
    %v544 = vpack.c.b16 %v364, %v352
    %v545 = vpack.c.b16 %v377, %v365
    %v546 = vpack.c.b16 %v378, %v366
    %v547 = vpack.c.b16 %v379, %v367
    %v548 = vpack.c.b16 %v380, %v368
    %v549 = vpack.c.b16 %v381, %v369
    %v550 = vpack.c.b16 %v382, %v370
    %v551 = vpack.c.b16 %v383, %v371
    %v552 = vpack.c.b16 %v384, %v372
    %v553 = vpack.c.b16 %v385, %v373
    %v554 = vpack.c.b16 %v386, %v374
    %v555 = vpack.c.b16 %v387, %v375
    %v556 = vpack.c.b16 %v388, %v376
    %v557 = vpack.c.b16 %v401, %v389
    %v558 = vpack.c.b16 %v402, %v390
    %v559 = vpack.c.b16 %v403, %v391
    %v560 = vpack.c.b16 %v404, %v392
    %v561 = vpack.c.b16 %v405, %v393
    %v562 = vpack.c.b16 %v406, %v394
    %v563 = vpack.c.b16 %v407, %v395
    %v564 = vpack.c.b16 %v408, %v396
    %v565 = vpack.c.b16 %v409, %v397
    %v566 = vpack.c.b16 %v410, %v398
    %v567 = vpack.c.b16 %v411, %v399
    %v568 = vpack.c.b16 %v412, %v400
    %v569 = vpack.c.b16 %v425, %v413
    %v570 = vpack.c.b16 %v426, %v414
    %v571 = vpack.c.b16 %v427, %v415
    %v572 = vpack.c.b16 %v428, %v416
    %v573 = vpack.c.b16 %v429, %v417
    %v574 = vpack.c.b16 %v430, %v418
    %v575 = vpack.c.b16 %v431, %v419
    %v576 = vpack.c.b16 %v432, %v420
    %v577 = vpack.c.b16 %v433, %v421
    %v578 = vpack.c.b16 %v434, %v422
    %v579 = vpack.c.b16 %v435, %v423
    %v580 = vpack.c.b16 %v436, %v424
    %v581 = vpack.c.b16 %v449, %v437
    %v582 = vpack.c.b16 %v450, %v438
    %v583 = vpack.c.b16 %v451, %v439
    %v584 = vpack.c.b16 %v452, %v440
    %v585 = vpack.c.b16 %v453, %v441
    %v586 = vpack.c.b16 %v454, %v442
    %v587 = vpack.c.b16 %v455, %v443
    %v588 = vpack.c.b16 %v456, %v444
    %v589 = vpack.c.b16 %v457, %v445
    %v590 = vpack.c.b16 %v458, %v446
    %v591 = vpack.c.b16 %v459, %v447
    %v592 = vpack.c.b16 %v460, %v448
    %v593 = vpack.c.b16 %v473, %v461
    %v594 = vpack.c.b16 %v474, %v462
    %v595 = vpack.c.b16 %v475, %v463
    %v596 = vpack.c.b16 %v476, %v464
    %v597 = vpack.c.b16 %v477, %v465
    %v598 = vpack.c.b16 %v478, %v466
    %v599 = vpack.c.b16 %v479, %v467
    %v600 = vpack.c.b16 %v480, %v468
    %v601 = vpack.c.b16 %v481, %v469
    %v602 = vpack.c.b16 %v482, %v470
    %v603 = vpack.c.b16 %v483, %v471
    %v604 = vpack.c.b16 %v484, %v472
    %v605 = vpack.c.b16 %v497, %v485
    %v606 = vpack.c.b16 %v498, %v486
    %v607 = vpack.c.b16 %v499, %v487
    %v608 = vpack.c.b16 %v500, %v488
    %v609 = vpack.c.b16 %v501, %v489
    %v610 = vpack.c.b16 %v502, %v490
    %v611 = vpack.c.b16 %v503, %v491
    %v612 = vpack.c.b16 %v504, %v492
    %v613 = vpack.c.b16 %v505, %v493
    %v614 = vpack.c.b16 %v506, %v494
    %v615 = vpack.c.b16 %v507, %v495
    %v616 = vpack.c.b16 %v508, %v496
    %v617 = vpack.c.b16 %v521, %v509
    %v618 = vpack.c.b16 %v522, %v510
    %v619 = vpack.c.b16 %v523, %v511
    %v620 = vpack.c.b16 %v524, %v512
    %v621 = vpack.c.b16 %v525, %v513
    %v622 = vpack.c.b16 %v526, %v514
    %v623 = vpack.c.b16 %v527, %v515
    %v624 = vpack.c.b16 %v528, %v516
    %v625 = vpack.c.b16 %v529, %v517
    %v626 = vpack.c.b16 %v530, %v518
    %v627 = vpack.c.b16 %v531, %v519
    %v628 = vpack.c.b16 %v532, %v520
    %725 = vmatpush.bf16.msra.mxu0 %v617
    %726 = vmatpush.bf16.msra.mxu0 %v605
    %727 = vmatpush.bf16.msra.mxu0 %v593
    %728 = vmatpush.bf16.msra.mxu0 %v581
    %729 = vmatpush.bf16.msra.mxu0 %v569
    %730 = vmatpush.bf16.msra.mxu0 %v557
    %731 = vmatpush.bf16.msra.mxu0 %v545
    %732 = vmatpush.bf16.msra.mxu0 %v533
    %733 = vmatmul.bf16.gmra.mxu0 %v243
    %v734 = vpop.f32.mrf.mxu0
    %v735 = vadd.f32 %v213, %v734
    %v736 = vpop.f32.mrf.mxu0
    %737 = vdwg.mxu0
    %738 = vmatpush.bf16.msra.mxu0 %v618
    %739 = vmatpush.bf16.msra.mxu0 %v606
    %740 = vmatpush.bf16.msra.mxu0 %v594
    %741 = vmatpush.bf16.msra.mxu0 %v582
    %742 = vmatpush.bf16.msra.mxu0 %v570
    %743 = vmatpush.bf16.msra.mxu0 %v558
    %744 = vmatpush.bf16.msra.mxu0 %v546
    %745 = vmatpush.bf16.msra.mxu0 %v534
    %746 = vmatmul.bf16.gmra.mxu0 %v243
    %v747 = vpop.f32.mrf.mxu0
    %v748 = vadd.f32 %v214, %v747
    %v749 = vpop.f32.mrf.mxu0
    %750 = vdwg.mxu0
    %751 = vmatpush.bf16.msra.mxu0 %v619
    %752 = vmatpush.bf16.msra.mxu0 %v607
    %753 = vmatpush.bf16.msra.mxu0 %v595
    %754 = vmatpush.bf16.msra.mxu0 %v583
    %755 = vmatpush.bf16.msra.mxu0 %v571
    %756 = vmatpush.bf16.msra.mxu0 %v559
    %757 = vmatpush.bf16.msra.mxu0 %v547
    %758 = vmatpush.bf16.msra.mxu0 %v535
    %759 = vmatmul.bf16.gmra.mxu0 %v243
    %v760 = vpop.f32.mrf.mxu0
    %v761 = vadd.f32 %v215, %v760
    %v762 = vpop.f32.mrf.mxu0
    %763 = vdwg.mxu0
    %764 = vmatpush.bf16.msra.mxu0 %v620
    %765 = vmatpush.bf16.msra.mxu0 %v608
    %766 = vmatpush.bf16.msra.mxu0 %v596
    %767 = vmatpush.bf16.msra.mxu0 %v584
    %768 = vmatpush.bf16.msra.mxu0 %v572
    %769 = vmatpush.bf16.msra.mxu0 %v560
    %770 = vmatpush.bf16.msra.mxu0 %v548
    %771 = vmatpush.bf16.msra.mxu0 %v536
    %772 = vmatmul.bf16.gmra.mxu0 %v243
    %v773 = vpop.f32.mrf.mxu0
    %v774 = vadd.f32 %v216, %v773
    %v775 = vpop.f32.mrf.mxu0
    %776 = vdwg.mxu0
    %777 = vmatpush.bf16.msra.mxu0 %v621
    %778 = vmatpush.bf16.msra.mxu0 %v609
    %779 = vmatpush.bf16.msra.mxu0 %v597
    %780 = vmatpush.bf16.msra.mxu0 %v585
    %781 = vmatpush.bf16.msra.mxu0 %v573
    %782 = vmatpush.bf16.msra.mxu0 %v561
    %783 = vmatpush.bf16.msra.mxu0 %v549
    %784 = vmatpush.bf16.msra.mxu0 %v537
    %785 = vmatmul.bf16.gmra.mxu0 %v243
    %v786 = vpop.f32.mrf.mxu0
    %v787 = vadd.f32 %v217, %v786
    %v788 = vpop.f32.mrf.mxu0
    %789 = vdwg.mxu0
    %790 = vmatpush.bf16.msra.mxu0 %v622
    %791 = vmatpush.bf16.msra.mxu0 %v610
    %792 = vmatpush.bf16.msra.mxu0 %v598
    %793 = vmatpush.bf16.msra.mxu0 %v586
    %794 = vmatpush.bf16.msra.mxu0 %v574
    %795 = vmatpush.bf16.msra.mxu0 %v562
    %796 = vmatpush.bf16.msra.mxu0 %v550
    %797 = vmatpush.bf16.msra.mxu0 %v538
    %798 = vmatmul.bf16.gmra.mxu0 %v243
    %v799 = vpop.f32.mrf.mxu0
    %v800 = vadd.f32 %v218, %v799
    %v801 = vpop.f32.mrf.mxu0
    %802 = vdwg.mxu0
    %803 = vmatpush.bf16.msra.mxu0 %v623
    %804 = vmatpush.bf16.msra.mxu0 %v611
    %805 = vmatpush.bf16.msra.mxu0 %v599
    %806 = vmatpush.bf16.msra.mxu0 %v587
    %807 = vmatpush.bf16.msra.mxu0 %v575
    %808 = vmatpush.bf16.msra.mxu0 %v563
    %809 = vmatpush.bf16.msra.mxu0 %v551
    %810 = vmatpush.bf16.msra.mxu0 %v539
    %811 = vmatmul.bf16.gmra.mxu0 %v243
    %v812 = vpop.f32.mrf.mxu0
    %v813 = vadd.f32 %v219, %v812
    %v814 = vpop.f32.mrf.mxu0
    %815 = vdwg.mxu0
    %816 = vmatpush.bf16.msra.mxu0 %v624
    %817 = vmatpush.bf16.msra.mxu0 %v612
    %818 = vmatpush.bf16.msra.mxu0 %v600
    %819 = vmatpush.bf16.msra.mxu0 %v588
    %820 = vmatpush.bf16.msra.mxu0 %v576
    %821 = vmatpush.bf16.msra.mxu0 %v564
    %822 = vmatpush.bf16.msra.mxu0 %v552
    %823 = vmatpush.bf16.msra.mxu0 %v540
    %824 = vmatmul.bf16.gmra.mxu0 %v243
    %v825 = vpop.f32.mrf.mxu0
    %v826 = vadd.f32 %v220, %v825
    %v827 = vpop.f32.mrf.mxu0
    %828 = vdwg.mxu0
    %829 = vmatpush.bf16.msra.mxu0 %v625
    %830 = vmatpush.bf16.msra.mxu0 %v613
    %831 = vmatpush.bf16.msra.mxu0 %v601
    %832 = vmatpush.bf16.msra.mxu0 %v589
    %833 = vmatpush.bf16.msra.mxu0 %v577
    %834 = vmatpush.bf16.msra.mxu0 %v565
    %835 = vmatpush.bf16.msra.mxu0 %v553
    %836 = vmatpush.bf16.msra.mxu0 %v541
    %837 = vmatmul.bf16.gmra.mxu0 %v243
    %v838 = vpop.f32.mrf.mxu0
    %v839 = vadd.f32 %v221, %v838
    %v840 = vpop.f32.mrf.mxu0
    %841 = vdwg.mxu0
    %842 = vmatpush.bf16.msra.mxu0 %v626
    %843 = vmatpush.bf16.msra.mxu0 %v614
    %844 = vmatpush.bf16.msra.mxu0 %v602
    %845 = vmatpush.bf16.msra.mxu0 %v590
    %846 = vmatpush.bf16.msra.mxu0 %v578
    %847 = vmatpush.bf16.msra.mxu0 %v566
    %848 = vmatpush.bf16.msra.mxu0 %v554
    %849 = vmatpush.bf16.msra.mxu0 %v542
    %850 = vmatmul.bf16.gmra.mxu0 %v243
    %v851 = vpop.f32.mrf.mxu0
    %v852 = vadd.f32 %v222, %v851
    %v853 = vpop.f32.mrf.mxu0
    %854 = vdwg.mxu0
    %855 = vmatpush.bf16.msra.mxu0 %v627
    %856 = vmatpush.bf16.msra.mxu0 %v615
    %857 = vmatpush.bf16.msra.mxu0 %v603
    %858 = vmatpush.bf16.msra.mxu0 %v591
    %859 = vmatpush.bf16.msra.mxu0 %v579
    %860 = vmatpush.bf16.msra.mxu0 %v567
    %861 = vmatpush.bf16.msra.mxu0 %v555
    %862 = vmatpush.bf16.msra.mxu0 %v543
    %863 = vmatmul.bf16.gmra.mxu0 %v243
    %v864 = vpop.f32.mrf.mxu0
    %v865 = vadd.f32 %v223, %v864
    %v866 = vpop.f32.mrf.mxu0
    %867 = vdwg.mxu0
    %868 = vmatpush.bf16.msra.mxu0 %v628
    %869 = vmatpush.bf16.msra.mxu0 %v616
    %870 = vmatpush.bf16.msra.mxu0 %v604
    %871 = vmatpush.bf16.msra.mxu0 %v592
    %872 = vmatpush.bf16.msra.mxu0 %v580
    %873 = vmatpush.bf16.msra.mxu0 %v568
    %874 = vmatpush.bf16.msra.mxu0 %v556
    %875 = vmatpush.bf16.msra.mxu0 %v544
    %876 = vmatmul.bf16.gmra.mxu0 %v243
    %v877 = vpop.f32.mrf.mxu0
    %v878 = vadd.f32 %v224, %v877
    %v879 = vpop.f32.mrf.mxu0
    %880 = vdwg.mxu0
    %v893 = vrot.slane %v748, 6
    %v894 = vrot.slane %v761, 4
    %v895 = vrot.slane %v774, 2
    %v896 = vrot.slane %v800, 6
    %v897 = vrot.slane %v813, 4
    %v898 = vrot.slane %v826, 2
    %v899 = vrot.slane %v852, 6
    %v900 = vrot.slane %v865, 4
    %v901 = vrot.slane %v878, 2
    %vm902 = vcmask 1041408
    %v903 = vsel %vm902, %v735, %v893
    %vm904 = vcmask 1045508
    %v905 = vsel %vm904, %v894, %v895
    %vm906 = vcmask 1043456
    %v907 = vsel %vm906, %v903, %v905
    %v908 = vsel %vm902, %v787, %v896
    %v909 = vsel %vm904, %v897, %v898
    %v910 = vsel %vm906, %v908, %v909
    %v911 = vsel %vm902, %v839, %v899
    %v912 = vsel %vm904, %v900, %v901
    %v913 = vsel %vm906, %v911, %v912
    %917 = vst [vmem:[#allocation10] sm:$0xff] %v907
    %918 = vst [vmem:[#allocation10 + $0x8] sm:$0xff] %v910
    %919 = vst [vmem:[#allocation10 + $0x10] sm:$0xff] %v913
    %v920 = vld [vmem:[#allocation8] sm:$0xf]
    %v921 = vld [vmem:[#allocation8 + $0x4] sm:$0xf]
    %v922 = vld [vmem:[#allocation8 + $0x8] sm:$0xf]
    %v923 = vld [vmem:[#allocation8 + $0xc] sm:$0xf]
    %v924 = vld [vmem:[#allocation8 + $0x10] sm:$0xf]
    %v925 = vld [vmem:[#allocation8 + $0x14] sm:$0xf]
    %v926 = vld [vmem:[#allocation8 + $0x18] sm:$0xf]
    %v927 = vld [vmem:[#allocation8 + $0x1c] sm:$0xf]
    %v928 = vld [vmem:[#allocation8 + $0x20] sm:$0xf]
    %v929 = vld [vmem:[#allocation8 + $0x24] sm:$0xf]
    %v930 = vld [vmem:[#allocation8 + $0x28] sm:$0xf]
    %v931 = vld [vmem:[#allocation8 + $0x2c] sm:$0xf]
    %v932 = vld [vmem:[#allocation8 + $0x30] sm:$0xf]
    %v933 = vld [vmem:[#allocation8 + $0x34] sm:$0xf]
    %v934 = vld [vmem:[#allocation8 + $0x38] sm:$0xf]
    %v935 = vld [vmem:[#allocation8 + $0x3c] sm:$0xf]
    %v936 = vld [vmem:[%s4] sm:$0x1]
    %v938 = vperm.slane %v936, 0
    %v956 = vunpack.c.l.b16 %v920
    %v957 = vunpack.c.l.b16 %v921
    %v958 = vunpack.c.l.b16 %v922
    %v959 = vunpack.c.l.b16 %v923
    %v960 = vunpack.c.l.b16 %v924
    %v961 = vunpack.c.l.b16 %v925
    %v962 = vunpack.c.l.b16 %v926
    %v963 = vunpack.c.l.b16 %v927
    %v964 = vunpack.c.l.b16 %v928
    %v965 = vunpack.c.l.b16 %v929
    %v966 = vunpack.c.l.b16 %v930
    %v967 = vunpack.c.l.b16 %v931
    %v968 = vunpack.c.l.b16 %v932
    %v969 = vunpack.c.l.b16 %v933
    %v970 = vunpack.c.l.b16 %v934
    %v971 = vunpack.c.l.b16 %v935
    %v972 = vpack.c.b16 %v957, %v956
    %v973 = vpack.c.b16 %v959, %v958
    %v974 = vpack.c.b16 %v961, %v960
    %v975 = vpack.c.b16 %v963, %v962
    %v976 = vpack.c.b16 %v965, %v964
    %v977 = vpack.c.b16 %v967, %v966
    %v978 = vpack.c.b16 %v969, %v968
    %v979 = vpack.c.b16 %v971, %v970
    %988 = vmatpush.bf16.msra.mxu0 %v979
    %989 = vmatpush.bf16.msra.mxu0 %v978
    %990 = vmatpush.bf16.msra.mxu0 %v977
    %991 = vmatpush.bf16.msra.mxu0 %v976
    %992 = vmatpush.bf16.msra.mxu0 %v975
    %993 = vmatpush.bf16.msra.mxu0 %v974
    %994 = vmatpush.bf16.msra.mxu0 %v973
    %995 = vmatpush.bf16.msra.mxu0 %v972
    %996 = vmatmul.bf16.gmra.mxu0 %v243
    %v997 = vpop.f32.mrf.mxu0
    %v998 = vadd.f32 %v938, %v997
    %v999 = vpop.f32.mrf.mxu0
    %1000 = vdwg.mxu0
    %1001 = vst [vmem:[%s6] sm:$0x3] %v998
    // Predicated region
    $region38: #{forward.1} parent=1 // pred_check
      _
    $region39: #{forward.1} parent=1 // pred_check_branch
      %1003 = sbr.rel (0) target = $region41
    $region40: #{forward.1} parent=1 // pred_region
      %1005 = vsyncadd [#allocation4], 0
      %s1007 = sshll.u32 [#allocation10], 4
      %s1008 = int_to_ptr.vmem [resolvable:$true] %s1007
      %s1009 = sshll.u32 %s5, 4
      %s1010 = int_to_ptr.hbm [resolvable:$true] %s1009
      %1012 = dma.vmem_to_hbm [thread:$0]  %s1008, 384, %s1010, [#allocation4]
    $region41: #{forward.1} parent=1 // pred_fallthru
      _
    // Predicated region
    $region42: #{forward.1} parent=1 // pred_check
      _
    $region43: #{forward.1} parent=1 // pred_check_branch
      %1014 = sbr.rel (0) target = $region45
    $region44: #{forward.1} parent=1 // pred_region
      _
    $region45: #{forward.1} parent=1 // pred_fallthru
      _
    // Predicated region
    $region46: #{forward.1} parent=1 // pred_check
      _
    $region47: #{forward.1} parent=1 // pred_check_branch
      %1016 = sbr.rel (0) target = $region49
    $region48: #{forward.1} parent=1 // pred_region
      %1018 = dma.done [#allocation4], 384
    $region49: #{forward.1} parent=1 // pred_fallthru
      _
    // Predicated region
    $region50: #{forward.1} parent=1 // pred_check
      _
    $region51: #{forward.1} parent=1 // pred_check_branch
      %1020 = sbr.rel (0) target = $region53
    $region52: #{forward.1} parent=1 // pred_region
      _
    $region53: #{forward.1} parent=1 // pred_fallthru
      _
    %1021 = vsyncpa [#allocation3], 1
    %1022 = vsyncpa [#allocation6], 1
    %1023 = vsyncpa [#allocation9], 1
    %1024 = vsyncpa [#allocation4], 1

</llo_original>
